<compile_context>
chip_gen: v7x
topology: tpu7x:2x2x1
jax: 0.10.0
libtpu: 0.0.40
codegen_flags: <defaults>
</compile_context>

<pallas_src>
import jax
import jax.numpy as jnp
from jax.experimental import pallas as pl
from jax.experimental.pallas import tpu as pltpu


def _yard_mlp_kernel(qh_ref, x_ref, w1f_ref, w2_ref, b2_ref, o_ref):
    # qh_ref : [B, H, 1] resident; per-batch (queue @ W1q.T + b1) as a column, f32
    # x_ref  : [F, TM]   stacks-feature tile, stack rows (TM) on lanes
    # w1f_ref: [H, F]    resident first-layer weights (stack-feature columns)
    # w2_ref : [E, H]    resident second-layer weights
    # b2_ref : [E, 1]    resident second-layer bias column, f32
    # o_ref  : [E, TM]   output tile, lane-dense along TM
    b = pl.program_id(0)
    x = x_ref[...]                                                     # [F, TM]
    h = jnp.dot(w1f_ref[...], x, preferred_element_type=jnp.float32)  # [H, TM] f32
    h = jnp.maximum(h + qh_ref[b], 0.0)                                # f32 elementwise
    y = jnp.dot(w2_ref[...], h.astype(w2_ref.dtype),
                preferred_element_type=jnp.float32)                    # [E, TM] f32
    o_ref[...] = jnp.maximum(y + b2_ref[...], 0.0).astype(o_ref.dtype)


def prepare_params(params, stack_features_size, io_dtype=jnp.float32):
    """One-time weight prep (call outside the per-step forward).

    Splits W1 into stack / queue column blocks.  Weights that feed the MXU
    inside the kernel are cast to `io_dtype`; biases stay fp32 (post-matmul
    elementwise math is fp32 on all generations).
    """
    w1, b1, w2, b2 = params["w1"], params["b1"], params["w2"], params["b2"]
    F = stack_features_size
    H = w1.shape[0]
    E = w2.shape[0]
    return {
        "w1f": w1[:, :F].astype(io_dtype),      # [H, F]   in-kernel
        "w1q_t": jnp.transpose(w1[:, F:]),      # [Q, H]   f32, used outside kernel
        "b1": b1.reshape(1, H),                 # [1, H]   f32
        "w2": w2.astype(io_dtype),              # [E, H]   in-kernel
        "b2_col": b2.reshape(E, 1),             # [E, 1]   f32, in-kernel
    }


def yard_encoder_forward(stacks_features, queue, prep):
    """stacks_features: [B, S, F] f32, queue: [B, Q] f32 -> [B, S, E]."""
    B, S, F = stacks_features.shape
    H = prep["w1f"].shape[0]
    E = prep["w2"].shape[0]
    io_dtype = prep["w1f"].dtype   # streamed-activation dtype (f32 or bf16)

    # Tiny per-batch queue contribution ([B, H]) in plain JAX; bias folded in.
    q_h = (queue @ prep["w1q_t"] + prep["b1"]).astype(jnp.float32)      # [B, H]
    q_h = q_h[:, :, None]                                               # [B, H, 1]

    # Wrapper-side layout plumbing: put the stack-row axis on lanes.
    stacks_t = jnp.transpose(stacks_features, (0, 2, 1)).astype(io_dtype)  # [B, F, S]

    # Lane tile: full S while it fits (block == full dim is always legal),
    # otherwise 2048 (a multiple of 128).  Double-buffered (F,TM)+(E,TM) tiles
    # at TM=2048 are < 0.5 MiB, far under any generation's scoped-VMEM default.
    TM = S if S <= 2048 else 2048
    grid = (B, pl.cdiv(S, TM))
    # Note: rows are independent, so padded columns in a partial last tile are
    # computed on garbage but their stores are clipped -> results unaffected.

    out_t = pl.pallas_call(
        _yard_mlp_kernel,
        out_shape=jax.ShapeDtypeStruct((B, E, S), io_dtype),
        grid=grid,
        in_specs=[
            pl.BlockSpec((B, H, 1), lambda b, s: (0, 0, 0)),       # resident q_h
            pl.BlockSpec((None, F, TM), lambda b, s: (b, 0, s)),   # pipelined x tile
            pl.BlockSpec((H, F), lambda b, s: (0, 0)),             # resident weights
            pl.BlockSpec((E, H), lambda b, s: (0, 0)),
            pl.BlockSpec((E, 1), lambda b, s: (0, 0)),
        ],
        out_specs=pl.BlockSpec((None, E, TM), lambda b, s: (b, 0, s)),
        compiler_params=pltpu.CompilerParams(
            dimension_semantics=("parallel", "parallel"),
        ),
    )(q_h, stacks_t, prep["w1f"], prep["w2"], prep["b2_col"])

    # Consumer-facing layout (matches the PyTorch module): [B, S, E].
    return jnp.transpose(out_t, (0, 2, 1))


def init_params(key, queue_size, stack_features_size, hidden_dim, encoded_dim):
    """Deterministic init matching nn.Linear parameter shapes ([out, in])."""
    input_dim = queue_size + stack_features_size
    k1, k2, k3, k4 = jax.random.split(key, 4)
    bound1 = 1.0 / jnp.sqrt(input_dim)
    bound2 = 1.0 / jnp.sqrt(hidden_dim)
    return {
        "w1": jax.random.uniform(k1, (hidden_dim, input_dim), jnp.float32,
                                 -bound1, bound1),
        "b1": jax.random.uniform(k2, (hidden_dim,), jnp.float32, -bound1, bound1),
        "w2": jax.random.uniform(k3, (encoded_dim, hidden_dim), jnp.float32,
                                 -bound2, bound2),
        "b2": jax.random.uniform(k4, (encoded_dim,), jnp.float32, -bound2, bound2),
    }


def _reference_forward(stacks_features, queue, params):
    """Pure-JAX reference matching the PyTorch forward."""
    B, S, _ = stacks_features.shape
    queue_tiled = jnp.broadcast_to(queue[:, None, :], (B, S, queue.shape[-1]))
    x = jnp.concatenate([stacks_features, queue_tiled], axis=-1)
    h = jnp.maximum(x @ params["w1"].T + params["b1"], 0.0)
    return jnp.maximum(h @ params["w2"].T + params["b2"], 0.0)


if __name__ == "__main__":
    # Small shapes consistent with the module's forward contract.
    B = 2            # batch
    S = 8            # Bay*Row (number of stacks)
    F = 4            # features per stack
    Q = 16           # queue size
    H = 32           # hidden_dim
    E = 16           # encoded_dim

    key = jax.random.PRNGKey(0)
    k_sf, k_q, k_p = jax.random.split(key, 3)

    stacks_features = jax.random.normal(k_sf, (B, S, F), jnp.float32)
    queue = jax.random.normal(k_q, (B, Q), jnp.float32)
    params = init_params(k_p, queue_size=Q, stack_features_size=F,
                         hidden_dim=H, encoded_dim=E)
    ref = _reference_forward(stacks_features, queue, params)

    fwd = jax.jit(yard_encoder_forward)

    # fp32-streamed path: exact semantics vs. the reference.
    prep32 = prepare_params(params, stack_features_size=F, io_dtype=jnp.float32)
    out32 = jax.block_until_ready(fwd(stacks_features, queue, prep32))
    assert out32.shape == (B, S, E), out32.shape
    assert jnp.allclose(out32, ref, atol=2e-5, rtol=2e-5), "fp32 mismatch vs reference"

    # bf16-streamed perf variant (halves HBM bytes moved); fp32 accumulation
    # and fp32 post-matmul elementwise math, checked with relaxed tolerance.
    prep16 = prepare_params(params, stack_features_size=F, io_dtype=jnp.bfloat16)
    out16 = jax.block_until_ready(fwd(stacks_features, queue, prep16))
    assert out16.shape == (B, S, E), out16.shape
    assert jnp.allclose(out16.astype(jnp.float32), ref, atol=5e-2, rtol=5e-2), \
        "bf16 mismatch vs reference"

    print("KERNEL_OK")
</pallas_src>

<mosaic_0001>
module attributes {stable_mosaic.version = 11 : i64} {
  func.func @_yard_mlp_kernel(%arg0: i32, %arg1: i32, %arg2: memref<2x32x1xf32, #tpu.memory_space<vmem>>, %arg3: memref<1x4x8xf32, #tpu.memory_space<vmem>>, %arg4: memref<32x4xf32, #tpu.memory_space<vmem>>, %arg5: memref<16x32xf32, #tpu.memory_space<vmem>>, %arg6: memref<16x1xf32, #tpu.memory_space<vmem>>, %arg7: memref<1x16x8xf32, #tpu.memory_space<vmem>>) attributes {dimension_semantics = [#tpu.dimension_semantics<parallel>, #tpu.dimension_semantics<parallel>], iteration_bounds = array<i64: 2, 1>, scalar_prefetch = 0 : i64, scratch_operands = 0 : i64, tpu.core_type = #tpu.core_type<tc>, window_params = [{pipeline_mode = #tpu.pipeline_mode<synchronous>, transform_indices = @transform_0, window_bounds = array<i64: 2, 32, 1>}, {transform_indices = @transform_1, window_bounds = array<i64: 1, 4, 8>}, {pipeline_mode = #tpu.pipeline_mode<synchronous>, transform_indices = @transform_2, window_bounds = array<i64: 32, 4>}, {pipeline_mode = #tpu.pipeline_mode<synchronous>, transform_indices = @transform_3, window_bounds = array<i64: 16, 32>}, {pipeline_mode = #tpu.pipeline_mode<synchronous>, transform_indices = @transform_4, window_bounds = array<i64: 16, 1>}, {transform_indices = @transform_5, window_bounds = array<i64: 1, 16, 8>}]} {
    %c0 = arith.constant 0 : index
    %c0_0 = arith.constant 0 : index
    %c0_1 = arith.constant 0 : index
    %0 = vector.load %arg3[%c0, %c0_0, %c0_1] : memref<1x4x8xf32, #tpu.memory_space<vmem>>, vector<1x4x8xf32>
    %1 = vector.shape_cast %0 : vector<1x4x8xf32> to vector<4x8xf32>
    %c0_2 = arith.constant 0 : index
    %c0_3 = arith.constant 0 : index
    %2 = vector.load %arg4[%c0_2, %c0_3] : memref<32x4xf32, #tpu.memory_space<vmem>>, vector<32x4xf32>
    %cst = arith.constant dense<0.000000e+00> : vector<32x8xf32>
    %3 = tpu.matmul %2, %1, %cst {dimension_numbers = #tpu.dot_dimension_numbers<[1], [0], [0], [1], [0, 0, 1, 1], [], []>} : vector<32x4xf32>, vector<4x8xf32>, vector<32x8xf32> -> vector<32x8xf32>
    %4 = arith.index_cast %arg0 : i32 to index
    %c0_4 = arith.constant 0 : index
    %c0_5 = arith.constant 0 : index
    %5 = vector.load %arg2[%4, %c0_4, %c0_5] : memref<2x32x1xf32, #tpu.memory_space<vmem>>, vector<1x32x1xf32>
    %6 = vector.shape_cast %5 : vector<1x32x1xf32> to vector<32x1xf32>
    %7 = vector.broadcast %6 : vector<32x1xf32> to vector<32x8xf32>
    %8 = arith.addf %3, %7 : vector<32x8xf32>
    %cst_6 = arith.constant 0.000000e+00 : f32
    %9 = vector.broadcast %cst_6 : f32 to vector<32x8xf32>
    %10 = arith.maximumf %8, %9 : vector<32x8xf32>
    %c0_7 = arith.constant 0 : index
    %c0_8 = arith.constant 0 : index
    %11 = vector.load %arg5[%c0_7, %c0_8] : memref<16x32xf32, #tpu.memory_space<vmem>>, vector<16x32xf32>
    %cst_9 = arith.constant dense<0.000000e+00> : vector<16x8xf32>
    %12 = tpu.matmul %11, %10, %cst_9 {dimension_numbers = #tpu.dot_dimension_numbers<[1], [0], [0], [1], [0, 0, 1, 1], [], []>} : vector<16x32xf32>, vector<32x8xf32>, vector<16x8xf32> -> vector<16x8xf32>
    %c0_10 = arith.constant 0 : index
    %c0_11 = arith.constant 0 : index
    %13 = vector.load %arg6[%c0_10, %c0_11] : memref<16x1xf32, #tpu.memory_space<vmem>>, vector<16x1xf32>
    %14 = vector.broadcast %13 : vector<16x1xf32> to vector<16x8xf32>
    %15 = arith.addf %12, %14 : vector<16x8xf32>
    %cst_12 = arith.constant 0.000000e+00 : f32
    %16 = vector.broadcast %cst_12 : f32 to vector<16x8xf32>
    %17 = arith.maximumf %15, %16 : vector<16x8xf32>
    %c0_13 = arith.constant 0 : index
    %c0_14 = arith.constant 0 : index
    %c0_15 = arith.constant 0 : index
    %18 = vector.load %arg7[%c0_13, %c0_14, %c0_15] : memref<1x16x8xf32, #tpu.memory_space<vmem>>, vector<1x16x8xf32>
    %19 = vector.shape_cast %18 : vector<1x16x8xf32> to vector<16x8xf32>
    %20 = vector.shape_cast %17 : vector<16x8xf32> to vector<1x16x8xf32>
    tpu.vector_store %arg7[%c0_13, %c0_14, %c0_15], %20 {strides = array<i32>} : memref<1x16x8xf32, #tpu.memory_space<vmem>>, vector<1x16x8xf32>,
    return
  }
  func.func @transform_0(%arg0: i32, %arg1: i32) -> (i32, i32, i32) {
    %c0_i32 = arith.constant 0 : i32
    %c0_i32_0 = arith.constant 0 : i32
    %c0_i32_1 = arith.constant 0 : i32
    %c0_i32_2 = arith.constant 0 : i32
    return %c0_i32, %c0_i32_0, %c0_i32_1 : i32, i32, i32
  }
  func.func @transform_1(%arg0: i32, %arg1: i32) -> (i32, i32, i32) {
    %c0_i32 = arith.constant 0 : i32
    %c0_i32_0 = arith.constant 0 : i32
    return %arg0, %c0_i32, %arg1 : i32, i32, i32
  }
  func.func @transform_2(%arg0: i32, %arg1: i32) -> (i32, i32) {
    %c0_i32 = arith.constant 0 : i32
    %c0_i32_0 = arith.constant 0 : i32
    %c0_i32_1 = arith.constant 0 : i32
    return %c0_i32, %c0_i32_0 : i32, i32
  }
  func.func @transform_3(%arg0: i32, %arg1: i32) -> (i32, i32) {
    %c0_i32 = arith.constant 0 : i32
    %c0_i32_0 = arith.constant 0 : i32
    %c0_i32_1 = arith.constant 0 : i32
    return %c0_i32, %c0_i32_0 : i32, i32
  }
  func.func @transform_4(%arg0: i32, %arg1: i32) -> (i32, i32) {
    %c0_i32 = arith.constant 0 : i32
    %c0_i32_0 = arith.constant 0 : i32
    %c0_i32_1 = arith.constant 0 : i32
    return %c0_i32, %c0_i32_0 : i32, i32
  }
  func.func @transform_5(%arg0: i32, %arg1: i32) -> (i32, i32, i32) {
    %c0_i32 = arith.constant 0 : i32
    %c0_i32_0 = arith.constant 0 : i32
    return %arg0, %c0_i32, %arg1 : i32, i32, i32
  }
}

</mosaic_0001>

<llo_original>
// kernel: yard_encoder_forward.1
$region0: #{yard_encoder_forward.1}
  #allocation0 [shape = 'u32[]', space=smem, size = 0x4, offset = 0x4, fixed_abs, tag = 'smem constant byte address 0x4 - core index']
  #allocation1 [shape = 'u32[144,128]{1,0:T(1,128)}', space=vmem, size = 0x12000, scoped, tag = 'internal scratch']
  %s0 = inlined_call_operand.vmem [shape: f32[2,32,1], index: 0, kind: input, shape index: {}]
  %s1 = inlined_call_operand.vmem [shape: f32[2,4,8], index: 1, kind: input, shape index: {}]
  %s2 = inlined_call_operand.vmem [shape: f32[32,4], index: 2, kind: input, shape index: {}]
  %s3 = inlined_call_operand.vmem [shape: f32[16,32], index: 3, kind: input, shape index: {}]
  %s4 = inlined_call_operand.vmem [shape: f32[16,1], index: 4, kind: input, shape index: {}]
  %s5 = inlined_call_operand.vmem [shape: f32[2,16,8], index: 5, kind: output, shape index: {}]
  %s6 = sld [smem:[#allocation0]]
  $region53: #{yard_encoder_forward.1} parent=0
    _
  %s8 = ssub.s32 1, %s6
  %s9 = scalar_select 0, %s8, %s6
  loop: start=0, step=1, limit=4
  $region2: #{yard_encoder_forward.1} parent=0 // loop_pre_header
    _
  $region3: #{yard_encoder_forward.1} parent=0 // loop_header
    %s11 = sphi 0, %s15
    %p12 = scmp.ge.s32.totalorder %s11, 4
    %s18 = sphi 0, %s30
    %s19 = sphi 0, %s26
    %s20 = sphi 0, %s18
    %s21 = sphi 0, %s19
    %s22 = sphi 0, %s20
    %s23 = sphi 0, %s21
    %s31 = sphi 0, %s31
    %s33 = sphi 0, %s31
    %s34 = sphi 0, %s33
    %s48 = sphi 0, %s34
    %s56 = sphi 0, %s58
    %s59 = sphi 0, %s56
    %s60 = sphi 0, %s59
    %s76 = sphi 0, %s60
    %s80 = sphi 0, %s80
    %s82 = sphi 0, %s80
    %s83 = sphi 0, %s82
    %s97 = sphi 0, %s83
    %s101 = sphi 0, %s101
    %s103 = sphi 0, %s101
    %s104 = sphi 0, %s103
    %s118 = sphi 0, %s104
    %s122 = sphi 0, %s122
    %s124 = sphi 0, %s122
    %s125 = sphi 0, %s124
    %s139 = sphi 0, %s125
    %s147 = sphi 0, %s149
    %s150 = sphi 0, %s147
    %s151 = sphi 0, %s150
    %s167 = sphi 0, %s151
  $region4: #{yard_encoder_forward.1} parent=0 // loop_header_branch
    %14 = sbr.rel (%p12) target = $region8
  $region5: #{yard_encoder_forward.1} parent=0 // loop_body
    %s16 = ssub.s32 %s11, 1
    %s17 = ssub.s32 %s11, 2
    %s24 = sadd.s32 1, %s19
    %p25 = scmp.ge.s32.totalorder %s24, 1
    %s26 = scalar_select %p25, 0, %s24
    %s27 = sadd.s32 1, %s18
    %s28 = scalar_select %p25, %s27, %s18
    %p29 = scmp.ge.s32.totalorder %s28, 2
    %s30 = scalar_select %p29, 0, %s28
    %s32 = sadd.s32 %s31, 1
    %p35 = scmp.eq.s32.totalorder %s11, 1
    %p36 = scmp.ne.s32.totalorder %s31, %s33
    %p37 = scmp.eq.s32.totalorder %s11, 0
    %p38 = por %p36, %p37
    %p39 = scmp.ne.s32.totalorder %s31, %s33
    %p40 = scmp.eq.s32.totalorder %s16, 1
    %p41 = por %p39, %p40
    %p42 = scmp.ne.s32.totalorder %s33, %s34
    %p43 = scmp.eq.s32.totalorder %s16, 0
    %p44 = por %p42, %p43
    %p45 = scmp.ne.s32.totalorder %s33, %s34
    %p46 = scmp.eq.s32.totalorder %s17, 1
    %p47 = por %p45, %p46
    %p49 = scmp.ne.s32.totalorder %s34, %s48
    %p50 = scmp.eq.s32.totalorder %s17, 0
    %p51 = por %p49, %p50
    %s52 = ssub.s32 %s18, %s30
    %s53 = ssub.s32 %s19, %s26
    %s54 = sor.u32 %s52, %s53
    %p55 = scmp.eq.s32.totalorder %s54, 0
    %s57 = sadd.s32 %s56, 1
    %s58 = scalar_select %p55, %s56, %s57
    %p61 = pneg %p55
    %p62 = scmp.eq.s32.totalorder %s11, 1
    %p63 = por %p61, %p62
    %p64 = scmp.ne.s32.totalorder %s56, %s59
    %p65 = scmp.eq.s32.totalorder %s11, 0
    %p66 = por %p64, %p65
    %p67 = scmp.ne.s32.totalorder %s56, %s59
    %p68 = scmp.eq.s32.totalorder %s16, 1
    %p69 = por %p67, %p68
    %p70 = scmp.ne.s32.totalorder %s59, %s60
    %p71 = scmp.eq.s32.totalorder %s16, 0
    %p72 = por %p70, %p71
    %p73 = scmp.ne.s32.totalorder %s59, %s60
    %p74 = scmp.eq.s32.totalorder %s17, 1
    %p75 = por %p73, %p74
    %p77 = scmp.ne.s32.totalorder %s60, %s76
    %p78 = scmp.eq.s32.totalorder %s17, 0
    %p79 = por %p77, %p78
    %s81 = sadd.s32 %s80, 1
    %p84 = scmp.eq.s32.totalorder %s11, 1
    %p85 = scmp.ne.s32.totalorder %s80, %s82
    %p86 = scmp.eq.s32.totalorder %s11, 0
    %p87 = por %p85, %p86
    %p88 = scmp.ne.s32.totalorder %s80, %s82
    %p89 = scmp.eq.s32.totalorder %s16, 1
    %p90 = por %p88, %p89
    %p91 = scmp.ne.s32.totalorder %s82, %s83
    %p92 = scmp.eq.s32.totalorder %s16, 0
    %p93 = por %p91, %p92
    %p94 = scmp.ne.s32.totalorder %s82, %s83
    %p95 = scmp.eq.s32.totalorder %s17, 1
    %p96 = por %p94, %p95
    %p98 = scmp.ne.s32.totalorder %s83, %s97
    %p99 = scmp.eq.s32.totalorder %s17, 0
    %p100 = por %p98, %p99
    %s102 = sadd.s32 %s101, 1
    %p105 = scmp.eq.s32.totalorder %s11, 1
    %p106 = scmp.ne.s32.totalorder %s101, %s103
    %p107 = scmp.eq.s32.totalorder %s11, 0
    %p108 = por %p106, %p107
    %p109 = scmp.ne.s32.totalorder %s101, %s103
    %p110 = scmp.eq.s32.totalorder %s16, 1
    %p111 = por %p109, %p110
    %p112 = scmp.ne.s32.totalorder %s103, %s104
    %p113 = scmp.eq.s32.totalorder %s16, 0
    %p114 = por %p112, %p113
    %p115 = scmp.ne.s32.totalorder %s103, %s104
    %p116 = scmp.eq.s32.totalorder %s17, 1
    %p117 = por %p115, %p116
    %p119 = scmp.ne.s32.totalorder %s104, %s118
    %p120 = scmp.eq.s32.totalorder %s17, 0
    %p121 = por %p119, %p120
    %s123 = sadd.s32 %s122, 1
    %p126 = scmp.eq.s32.totalorder %s11, 1
    %p127 = scmp.ne.s32.totalorder %s122, %s124
    %p128 = scmp.eq.s32.totalorder %s11, 0
    %p129 = por %p127, %p128
    %p130 = scmp.ne.s32.totalorder %s122, %s124
    %p131 = scmp.eq.s32.totalorder %s16, 1
    %p132 = por %p130, %p131
    %p133 = scmp.ne.s32.totalorder %s124, %s125
    %p134 = scmp.eq.s32.totalorder %s16, 0
    %p135 = por %p133, %p134
    %p136 = scmp.ne.s32.totalorder %s124, %s125
    %p137 = scmp.eq.s32.totalorder %s17, 1
    %p138 = por %p136, %p137
    %p140 = scmp.ne.s32.totalorder %s125, %s139
    %p141 = scmp.eq.s32.totalorder %s17, 0
    %p142 = por %p140, %p141
    %s143 = ssub.s32 %s18, %s30
    %s144 = ssub.s32 %s19, %s26
    %s145 = sor.u32 %s143, %s144
    %p146 = scmp.eq.s32.totalorder %s145, 0
    %s148 = sadd.s32 %s147, 1
    %s149 = scalar_select %p146, %s147, %s148
    %p152 = pneg %p146
    %p153 = scmp.eq.s32.totalorder %s11, 1
    %p154 = por %p152, %p153
    %p155 = scmp.ne.s32.totalorder %s147, %s150
    %p156 = scmp.eq.s32.totalorder %s11, 0
    %p157 = por %p155, %p156
    %p158 = scmp.ne.s32.totalorder %s147, %s150
    %p159 = scmp.eq.s32.totalorder %s16, 1
    %p160 = por %p158, %p159
    %p161 = scmp.ne.s32.totalorder %s150, %s151
    %p162 = scmp.eq.s32.totalorder %s16, 0
    %p163 = por %p161, %p162
    %p164 = scmp.ne.s32.totalorder %s150, %s151
    %p165 = scmp.eq.s32.totalorder %s17, 1
    %p166 = por %p164, %p165
    %p168 = scmp.ne.s32.totalorder %s151, %s167
    %p169 = scmp.eq.s32.totalorder %s17, 0
    %p170 = por %p168, %p169
    %p171 = scmp.le.s32.totalorder 1, %s11
    %p172 = scmp.lt.s32.totalorder %s11, 3
    %p173 = pnand %p171, %p172
    %p174 = pneg %p173
    // Predicated region
    $region9: #{yard_encoder_forward.1} parent=5 // pred_check
      _
    $region10: #{yard_encoder_forward.1} parent=5 // pred_check_branch
      %176 = sbr.rel (%p173) target = $region12
    $region11: #{yard_encoder_forward.1} parent=5 // pred_region
      %s177 = ssub.s32 %s11, 1
      // Predicated region
      $region13: #{yard_encoder_forward.1} parent=11 // pred_check
        %p178 = pneg %p44
      $region14: #{yard_encoder_forward.1} parent=11 // pred_check_branch
        %180 = sbr.rel (%p178) target = $region16
      $region15: #{yard_encoder_forward.1} parent=11 // pred_region
        _
      $region16: #{yard_encoder_forward.1} parent=11 // pred_fallthru
        _
      // Predicated region
      $region17: #{yard_encoder_forward.1} parent=11 // pred_check
        %p181 = pneg %p93
      $region18: #{yard_encoder_forward.1} parent=11 // pred_check_branch
        %183 = sbr.rel (%p181) target = $region20
      $region19: #{yard_encoder_forward.1} parent=11 // pred_region
        _
      $region20: #{yard_encoder_forward.1} parent=11 // pred_fallthru
        _
      // Predicated region
      $region21: #{yard_encoder_forward.1} parent=11 // pred_check
        %p184 = pneg %p114
      $region22: #{yard_encoder_forward.1} parent=11 // pred_check_branch
        %186 = sbr.rel (%p184) target = $region24
      $region23: #{yard_encoder_forward.1} parent=11 // pred_region
        _
      $region24: #{yard_encoder_forward.1} parent=11 // pred_fallthru
        _
      // Predicated region
      $region25: #{yard_encoder_forward.1} parent=11 // pred_check
        %p187 = pneg %p135
      $region26: #{yard_encoder_forward.1} parent=11 // pred_check_branch
        %189 = sbr.rel (%p187) target = $region28
      $region27: #{yard_encoder_forward.1} parent=11 // pred_region
        _
      $region28: #{yard_encoder_forward.1} parent=11 // pred_fallthru
        _
    $region12: #{yard_encoder_forward.1} parent=5 // pred_fallthru
      _
    %p190 = scmp.lt.s32.totalorder %s11, 2
    // Predicated region
    $region29: #{yard_encoder_forward.1} parent=5 // pred_check
      %p191 = pneg %p190
    $region30: #{yard_encoder_forward.1} parent=5 // pred_check_branch
      %193 = sbr.rel (%p191) target = $region32
    $region31: #{yard_encoder_forward.1} parent=5 // pred_region
      // Predicated region
      $region33: #{yard_encoder_forward.1} parent=31 // pred_check
        %p194 = pneg %p66
      $region34: #{yard_encoder_forward.1} parent=31 // pred_check_branch
        %196 = sbr.rel (%p194) target = $region36
      $region35: #{yard_encoder_forward.1} parent=31 // pred_region
        %p197 = scmp.lt.s32.totalorder %s18, 1
        %s198 = scalar_select %p197, %s18, 1
        %p199 = scmp.lt.s32.totalorder %s19, 0
        %s200 = scalar_select %p199, %s19, 0
        %s201 = sadd.s32 %s200, %s198
        %s202 = smul.addr %s201, 4
        %s203 = scalar_lea.vmem %s1, %s202
      $region36: #{yard_encoder_forward.1} parent=31 // pred_fallthru
        _
    $region32: #{yard_encoder_forward.1} parent=5 // pred_fallthru
      _
    %p204 = scmp.le.s32.totalorder 1, %s11
    %p205 = scmp.lt.s32.totalorder %s11, 3
    %p206 = pnand %p204, %p205
    %p207 = pneg %p206
    // Predicated region
    $region37: #{yard_encoder_forward.1} parent=5 // pred_check
      _
    $region38: #{yard_encoder_forward.1} parent=5 // pred_check_branch
      %209 = sbr.rel (%p206) target = $region40
    $region39: #{yard_encoder_forward.1} parent=5 // pred_region
      %s210 = ssub.s32 %s11, 1
      %p211 = pneg %p44
      %p212 = pneg %p41
      %p213 = scmp.lt.s32.totalorder %s20, 1
      %s214 = scalar_select %p213, %s20, 1
      %p215 = scmp.lt.s32.totalorder %s21, 0
      %s216 = scalar_select %p215, %s21, 0
      %s217 = sadd.s32 %s216, %s214
      %s218 = smul.addr %s217, 4
      %s219 = scalar_lea.vmem %s1, %s218
      %p220 = pneg %p72
      %p221 = pneg %p69
      %p222 = pneg %p93
      %p223 = pneg %p90
      %p224 = pneg %p114
      %p225 = pneg %p111
      %p226 = pneg %p135
      %p227 = pneg %p132
      %p228 = pneg %p163
      %p229 = pneg %p160
      %p230 = scmp.lt.s32.totalorder %s20, 1
      %s231 = scalar_select %p230, %s20, 1
      %p232 = scmp.lt.s32.totalorder %s21, 0
      %s233 = scalar_select %p232, %s21, 0
      %s234 = smul.addr %s231, 2
      %s235 = sadd.s32 %s233, %s234
      %s236 = smul.addr %s235, 8
      %s237 = scalar_lea.vmem %s5, %s236
      %p238 = scmp.lt.s32.totalorder %s20, 1
      %s239 = scalar_select %p238, %s20, 1
      %p240 = scmp.lt.s32.totalorder %s21, 0
      %s241 = scalar_select %p240, %s21, 0
      %s242 = sadd.s32 %s241, %s239
      %s243 = smul.addr %s242, 4
      %s244 = scalar_lea.vmem %s1, %s243
      %p245 = scmp.lt.s32.totalorder %s20, 1
      %s246 = scalar_select %p245, %s20, 1
      %p247 = scmp.lt.s32.totalorder %s21, 0
      %s248 = scalar_select %p247, %s21, 0
      %s249 = smul.addr %s246, 2
      %s250 = sadd.s32 %s248, %s249
      %s251 = smul.addr %s250, 8
      %s252 = scalar_lea.vmem %s5, %s251
      %v253 = vld [vmem:[%s244] sm:$0xf]
      %v254 = vld [vmem:[%s2] sm:$0xff]
      %v255 = vld [vmem:[%s2 + $0x8] sm:$0xff]
      %v256 = vld [vmem:[%s2 + $0x10] sm:$0xff]
      %v257 = vld [vmem:[%s2 + $0x18] sm:$0xff]
      %s258 = smul.u32 %s20, 32
      %s259 = scalar_lea.vmem %s0, %s258
      %v260 = vld [vmem:[%s259] sm:$0xff]
      %v261 = vld [vmem:[%s259 + $0x8] sm:$0xff]
      %v262 = vld [vmem:[%s259 + $0x10] sm:$0xff]
      %v263 = vld [vmem:[%s259 + $0x18] sm:$0xff]
      %265 = vset.pattern.permute.xlu0 0
      %266 = vperm.xlu0 %265, %v260
      %v267 = vpop.permute.xlu0 %266
      %270 = vset.pattern.permute.xlu0 0
      %271 = vperm.xlu0 %270, %v261
      %v272 = vpop.permute.xlu0 %271
      %275 = vset.pattern.permute.xlu0 0
      %276 = vperm.xlu0 %275, %v262
      %v277 = vpop.permute.xlu0 %276
      %280 = vset.pattern.permute.xlu0 0
      %281 = vperm.xlu0 %280, %v263
      %v282 = vpop.permute.xlu0 %281
      %vm284 = vcmask 31744
      %v286 = vsel %vm284, %v254, 0
      %v289 = vsel %vm284, %v255, 0
      %v292 = vsel %vm284, %v256, 0
      %v295 = vsel %vm284, %v257, 0
      %vm297 = vcmask 1043456
      %v299 = vsel %vm297, %v253, 0
      %301 = vmatprep.subr.mxu0 0.0
      %302 = vmatpush1.msra.mxu0 %v299
      %303 = vmatprep.subr.mxu0 0.0
      %304 = vmatpush1.msra.mxu0 0.0
      %305 = vmatprep.subr.mxu0 0.0
      %306 = vmatpush1.msra.mxu0 0.0
      %307 = vmatprep.subr.mxu0 0.0
      %308 = vmatpush1.msra.mxu0 0.0
      %309 = vmatprep.subr.mxu0 0.0
      %310 = vmatpush1.msra.mxu0 0.0
      %311 = vmatprep.subr.mxu0 0.0
      %312 = vmatpush1.msra.mxu0 0.0
      %313 = vmatprep.subr.mxu0 0.0
      %314 = vmatpush1.msra.mxu0 0.0
      %315 = vmatprep.subr.mxu0 0.0
      %316 = vmatpush1.msra.mxu0 0.0
      %317 = vmatprep.subr.mxu0 0.0
      %318 = vmatpush1.msra.mxu0 0.0
      %319 = vmatprep.subr.mxu0 0.0
      %320 = vmatpush1.msra.mxu0 0.0
      %321 = vmatprep.subr.mxu0 0.0
      %322 = vmatpush1.msra.mxu0 0.0
      %323 = vmatprep.subr.mxu0 0.0
      %324 = vmatpush1.msra.mxu0 0.0
      %325 = vmatprep.subr.mxu0 0.0
      %326 = vmatpush1.msra.mxu0 0.0
      %327 = vmatprep.subr.mxu0 0.0
      %328 = vmatpush1.msra.mxu0 0.0
      %329 = vmatprep.subr.mxu0 0.0
      %330 = vmatpush1.msra.mxu0 0.0
      %331 = vmatprep.subr.mxu0 0.0
      %332 = vmatpush1.msra.mxu0 0.0
      %333 = vmatprep.subr.mxu0 0.0
      %334 = vmatpush1.msra.mxu0 0.0
      %335 = vmatprep.subr.mxu0 0.0
      %336 = vmatpush1.msra.mxu0 0.0
      %337 = vmatprep.subr.mxu0 0.0
      %338 = vmatpush1.msra.mxu0 0.0
      %339 = vmatprep.subr.mxu0 0.0
      %340 = vmatpush1.msra.mxu0 0.0
      %341 = vmatprep.subr.mxu0 0.0
      %342 = vmatpush1.msra.mxu0 0.0
      %343 = vmatprep.subr.mxu0 0.0
      %344 = vmatpush1.msra.mxu0 0.0
      %345 = vmatprep.subr.mxu0 0.0
      %346 = vmatpush1.msra.mxu0 0.0
      %347 = vmatprep.subr.mxu0 0.0
      %348 = vmatpush1.msra.mxu0 0.0
      %349 = vmatprep.subr.mxu0 0.0
      %350 = vmatpush1.msra.mxu0 0.0
      %351 = vmatprep.subr.mxu0 0.0
      %352 = vmatpush1.msra.mxu0 0.0
      %353 = vmatprep.subr.mxu0 0.0
      %354 = vmatpush1.msra.mxu0 0.0
      %355 = vmatprep.subr.mxu0 0.0
      %356 = vmatpush1.msra.mxu0 0.0
      %357 = vmatprep.subr.mxu0 0.0
      %358 = vmatpush1.msra.mxu0 0.0
      %359 = vmatprep.subr.mxu0 0.0
      %360 = vmatpush1.msra.mxu0 0.0
      %361 = vmatprep.subr.mxu0 0.0
      %362 = vmatpush1.msra.mxu0 0.0
      %363 = vmatprep.subr.mxu0 0.0
      %364 = vmatpush1.msra.mxu0 0.0
      %365 = vmatprep.mubr.f32.mxu0 0.0
      %366 = vmatmul.mubr.f32.gmra.mrb[0].mxu0 %v286
      %v367 = vpop.f32.mrb[0].mxu0
      %v368 = vadd.f32 %v267, %v367
      %v369 = vpop.f32.mrb[0].mxu0
      %370 = vmatprep.mubr.f32.mxu0 0.0
      %371 = vmatmul.mubr.f32.gmra.mrb[0].mxu0 %v289
      %v372 = vpop.f32.mrb[0].mxu0
      %v373 = vadd.f32 %v272, %v372
      %v374 = vpop.f32.mrb[0].mxu0
      %375 = vmatprep.mubr.f32.mxu0 0.0
      %376 = vmatmul.mubr.f32.gmra.mrb[0].mxu0 %v292
      %v377 = vpop.f32.mrb[0].mxu0
      %v378 = vadd.f32 %v277, %v377
      %v379 = vpop.f32.mrb[0].mxu0
      %380 = vmatprep.mubr.f32.mxu0 0.0
      %381 = vmatmul.mubr.f32.gmra.mrb[0].mxu0 %v295
      %v382 = vpop.f32.mrb[0].mxu0
      %v383 = vadd.f32 %v282, %v382
      %v384 = vpop.f32.mrb[0].mxu0
      %385 = vdwg.mxu0
      %v386 = vmax.f32 %v368, 0.0
      %v387 = vmax.f32 %v373, 0.0
      %v388 = vmax.f32 %v378, 0.0
      %v389 = vmax.f32 %v383, 0.0
      %v390 = vld [vmem:[%s3] sm:$0xff]
      %v391 = vld [vmem:[%s3 + $0x8] sm:$0xff]
      %v392 = vld [vmem:[%s4] sm:$0xff]
      %v393 = vld [vmem:[%s4 + $0x8] sm:$0xff]
      %395 = vset.pattern.permute.xlu0 0
      %396 = vperm.xlu0 %395, %v392
      %v397 = vpop.permute.xlu0 %396
      %400 = vset.pattern.permute.xlu0 0
      %401 = vperm.xlu0 %400, %v393
      %v402 = vpop.permute.xlu0 %401
      %vm404 = vcmask 261120
      %v406 = vsel %vm404, %v390, 0
      %v409 = vsel %vm404, %v391, 0
      %411 = vmatprep.subr.mxu0 0.0
      %412 = vmatpush1.msra.mxu0 %v386
      %413 = vmatprep.subr.mxu0 0.0
      %414 = vmatpush1.msra.mxu0 %v387
      %415 = vmatprep.subr.mxu0 0.0
      %416 = vmatpush1.msra.mxu0 %v388
      %417 = vmatprep.subr.mxu0 0.0
      %418 = vmatpush1.msra.mxu0 %v389
      %419 = vmatprep.subr.mxu0 0.0
      %420 = vmatpush1.msra.mxu0 0.0
      %421 = vmatprep.subr.mxu0 0.0
      %422 = vmatpush1.msra.mxu0 0.0
      %423 = vmatprep.subr.mxu0 0.0
      %424 = vmatpush1.msra.mxu0 0.0
      %425 = vmatprep.subr.mxu0 0.0
      %426 = vmatpush1.msra.mxu0 0.0
      %427 = vmatprep.subr.mxu0 0.0
      %428 = vmatpush1.msra.mxu0 0.0
      %429 = vmatprep.subr.mxu0 0.0
      %430 = vmatpush1.msra.mxu0 0.0
      %431 = vmatprep.subr.mxu0 0.0
      %432 = vmatpush1.msra.mxu0 0.0
      %433 = vmatprep.subr.mxu0 0.0
      %434 = vmatpush1.msra.mxu0 0.0
      %435 = vmatprep.subr.mxu0 0.0
      %436 = vmatpush1.msra.mxu0 0.0
      %437 = vmatprep.subr.mxu0 0.0
      %438 = vmatpush1.msra.mxu0 0.0
      %439 = vmatprep.subr.mxu0 0.0
      %440 = vmatpush1.msra.mxu0 0.0
      %441 = vmatprep.subr.mxu0 0.0
      %442 = vmatpush1.msra.mxu0 0.0
      %443 = vmatprep.subr.mxu0 0.0
      %444 = vmatpush1.msra.mxu0 0.0
      %445 = vmatprep.subr.mxu0 0.0
      %446 = vmatpush1.msra.mxu0 0.0
      %447 = vmatprep.subr.mxu0 0.0
      %448 = vmatpush1.msra.mxu0 0.0
      %449 = vmatprep.subr.mxu0 0.0
      %450 = vmatpush1.msra.mxu0 0.0
      %451 = vmatprep.subr.mxu0 0.0
      %452 = vmatpush1.msra.mxu0 0.0
      %453 = vmatprep.subr.mxu0 0.0
      %454 = vmatpush1.msra.mxu0 0.0
      %455 = vmatprep.subr.mxu0 0.0
      %456 = vmatpush1.msra.mxu0 0.0
      %457 = vmatprep.subr.mxu0 0.0
      %458 = vmatpush1.msra.mxu0 0.0
      %459 = vmatprep.subr.mxu0 0.0
      %460 = vmatpush1.msra.mxu0 0.0
      %461 = vmatprep.subr.mxu0 0.0
      %462 = vmatpush1.msra.mxu0 0.0
      %463 = vmatprep.subr.mxu0 0.0
      %464 = vmatpush1.msra.mxu0 0.0
      %465 = vmatprep.subr.mxu0 0.0
      %466 = vmatpush1.msra.mxu0 0.0
      %467 = vmatprep.subr.mxu0 0.0
      %468 = vmatpush1.msra.mxu0 0.0
      %469 = vmatprep.subr.mxu0 0.0
      %470 = vmatpush1.msra.mxu0 0.0
      %471 = vmatprep.subr.mxu0 0.0
      %472 = vmatpush1.msra.mxu0 0.0
      %473 = vmatprep.subr.mxu0 0.0
      %474 = vmatpush1.msra.mxu0 0.0
      %475 = vmatprep.mubr.f32.mxu0 0.0
      %476 = vmatmul.mubr.f32.gmra.mrb[0].mxu0 %v406
      %v477 = vpop.f32.mrb[0].mxu0
      %v478 = vadd.f32 %v397, %v477
      %v479 = vpop.f32.mrb[0].mxu0
      %480 = vmatprep.mubr.f32.mxu0 0.0
      %481 = vmatmul.mubr.f32.gmra.mrb[0].mxu0 %v409
      %v482 = vpop.f32.mrb[0].mxu0
      %v483 = vadd.f32 %v402, %v482
      %v484 = vpop.f32.mrb[0].mxu0
      %485 = vdwg.mxu0
      %v486 = vmax.f32 %v478, 0.0
      %v487 = vmax.f32 %v483, 0.0
      %vm488 = vcmask 64512
      %489 = vst.msk [vmem:[%s252] sm:$0xff] %vm488, %v486
      %490 = vst.msk [vmem:[%s252 + $0x8] sm:$0xff] %vm488, %v487
      %p491 = scmp.lt.s32.totalorder %s20, 1
      %s492 = scalar_select %p491, %s20, 1
      %p493 = scmp.lt.s32.totalorder %s21, 0
      %s494 = scalar_select %p493, %s21, 0
      %s495 = smul.addr %s492, 2
      %s496 = sadd.s32 %s494, %s495
      %s497 = smul.addr %s496, 8
      %s498 = scalar_lea.vmem %s5, %s497
      // Predicated region
      $region41: #{yard_encoder_forward.1} parent=39 // pred_check
        %p499 = pneg %p160
      $region42: #{yard_encoder_forward.1} parent=39 // pred_check_branch
        %501 = sbr.rel (%p499) target = $region44
      $region43: #{yard_encoder_forward.1} parent=39 // pred_region
        _
      $region44: #{yard_encoder_forward.1} parent=39 // pred_fallthru
        _
    $region40: #{yard_encoder_forward.1} parent=5 // pred_fallthru
      _
    %p502 = scmp.le.s32.totalorder 2, %s11
    // Predicated region
    $region45: #{yard_encoder_forward.1} parent=5 // pred_check
      %p503 = pneg %p502
    $region46: #{yard_encoder_forward.1} parent=5 // pred_check_branch
      %505 = sbr.rel (%p503) target = $region48
    $region47: #{yard_encoder_forward.1} parent=5 // pred_region
      %s506 = ssub.s32 %s11, 2
      // Predicated region
      $region49: #{yard_encoder_forward.1} parent=47 // pred_check
        %p507 = pneg %p166
      $region50: #{yard_encoder_forward.1} parent=47 // pred_check_branch
        %509 = sbr.rel (%p507) target = $region52
      $region51: #{yard_encoder_forward.1} parent=47 // pred_region
        %p510 = scmp.lt.s32.totalorder %s22, 1
        %s511 = scalar_select %p510, %s22, 1
        %p512 = scmp.lt.s32.totalorder %s23, 0
        %s513 = scalar_select %p512, %s23, 0
        %s514 = smul.addr %s511, 2
        %s515 = sadd.s32 %s513, %s514
        %s516 = smul.addr %s515, 8
        %s517 = scalar_lea.vmem %s5, %s516
      $region52: #{yard_encoder_forward.1} parent=47 // pred_fallthru
        _
    $region48: #{yard_encoder_forward.1} parent=5 // pred_fallthru
      _
  $region6: #{yard_encoder_forward.1} parent=0 // loop_footer
    %s15 = sadd.s32 1, %s11
  $region7: #{yard_encoder_forward.1} parent=0 // loop_footer_branch
    %10 = sbr.rel target = $region3
  $region8: #{yard_encoder_forward.1} parent=0 // loop_exit
    _

</llo_original>
